<compile_context>
chip_gen: v7x
topology: tpu7x:2x2x1
jax: 0.10.0
libtpu: 0.0.40
codegen_flags: <defaults>
</compile_context>

<pallas_src>
import jax
import jax.numpy as jnp
from jax.experimental import pallas as pl
from jax.experimental.pallas import tpu as pltpu


def _round_up(x, m):
    return ((x + m - 1) // m) * m


def _cost(N, Cin, Cout, HW):
    return pl.CostEstimate(
        flops=2 * N * HW * Cout * Cin,
        transcendentals=0,
        bytes_accessed=(N * Cin * HW * 4          # x (f32)
                        + Cout * Cin * 2          # W (bf16)
                        + N * Cout * HW * 4       # out (f32)
                        + Cout * 4),              # bias
    )


# ---------------------------------------------------------------------------
# Path A: channel-major (NCHW-native, zero transposes).  Used when HW >= 128.
#   per batch element:  out[b] = W @ x[b],   x[b]: (Cin, HW), out[b]: (Cout, HW)
# ---------------------------------------------------------------------------
def _cmajor_kernel(x_ref, w_ref, b_ref, o_ref):
    # x_ref: (Cin, thw) f32 | w_ref: (Cout, Cin) bf16 | b_ref: (Cout, 1) f32
    acc = jnp.dot(w_ref[...], x_ref[...].astype(jnp.bfloat16),
                  preferred_element_type=jnp.float32)
    o_ref[...] = (acc + b_ref[...]).astype(o_ref.dtype)


def _pick_spatial_tile(HW, pref):
    """Return (lane_tile, padded_HW); prefer 256-aligned tiles (v6e/v7x MXU)."""
    if HW % 128 == 0:
        for align in (256, 128):
            if HW % align == 0:
                t = max(align, (min(pref, HW) // align) * align)
                while HW % t:
                    t -= align
                return t, HW
    # HW not 128-aligned: pad up to a 256-aligned tile (VMEM guard for v7x).
    t = min(_round_up(HW, 256), max(256, (pref // 256) * 256))
    return t, _round_up(HW, t)


def _conv1x1_cmajor(x_nchw, weight, bias, *, thw_pref=1024):
    N, Cin, H, W = x_nchw.shape
    Cout = weight.shape[0]
    HW = H * W

    thw, HW_pad = _pick_spatial_tile(HW, thw_pref)
    xm = x_nchw.reshape(N, Cin, HW)                       # free reshape, stays f32
    if HW_pad != HW:                                      # pad instead of full-HW block
        xm = jnp.pad(xm, ((0, 0), (0, 0), (0, HW_pad - HW)))
    wm = weight.reshape(Cout, Cin).astype(jnp.bfloat16)   # resident, 256 KiB
    bm = bias.reshape(Cout, 1).astype(jnp.float32)

    grid = (N, HW_pad // thw)                             # no Cout axis: W fetched once
    out = pl.pallas_call(
        _cmajor_kernel,
        out_shape=jax.ShapeDtypeStruct((N, Cout, HW_pad), x_nchw.dtype),
        grid_spec=pltpu.PrefetchScalarGridSpec(
            num_scalar_prefetch=0,
            grid=grid,
            in_specs=[
                pl.BlockSpec((None, Cin, thw), lambda b, j: (b, 0, j)),   # x (f32)
                pl.BlockSpec((Cout, Cin),      lambda b, j: (0, 0)),      # W (bf16)
                pl.BlockSpec((Cout, 1),        lambda b, j: (0, 0)),      # bias
            ],
            out_specs=pl.BlockSpec((None, Cout, thw), lambda b, j: (b, 0, j)),
        ),
        compiler_params=pltpu.CompilerParams(
            dimension_semantics=("parallel", "parallel")),
        cost_estimate=_cost(N, Cin, Cout, HW),
    )(xm, wm, bm)

    if HW_pad != HW:
        out = out[:, :, :HW]
    return out.reshape(N, Cout, H, W)


# ---------------------------------------------------------------------------
# Path B: spatial-major (lane-dense 256-wide output).  Used when HW < 128.
#   out_rows = x_rows @ W^T,  rows = batch*spatial folded together.
# ---------------------------------------------------------------------------
def _smajor_kernel(x_ref, wt_ref, b_ref, o_ref):
    # x_ref: (tm, Cin) f32 | wt_ref: (Cin, Cout) bf16 | b_ref: (1, Cout) f32
    acc = jnp.dot(x_ref[...].astype(jnp.bfloat16), wt_ref[...],
                  preferred_element_type=jnp.float32)
    o_ref[...] = (acc + b_ref[...]).astype(o_ref.dtype)


def _conv1x1_smajor(x_nchw, weight, bias, *, tm_pref=512):
    N, Cin, H, W = x_nchw.shape
    Cout = weight.shape[0]
    HW = H * W
    M = N * HW

    # Tiny wrapper-side transpose (only taken for small HW) so the output tile
    # is lane-dense (last dim = Cout = 256) and the MXU runs at full width.
    xm = jnp.transpose(x_nchw.reshape(N, Cin, HW), (0, 2, 1)).reshape(M, Cin)
    tm = min(tm_pref, _round_up(M, 8))
    M_pad = _round_up(M, tm)
    if M_pad != M:
        xm = jnp.pad(xm, ((0, M_pad - M), (0, 0)))
    wt = weight.reshape(Cout, Cin).T.astype(jnp.bfloat16)    # (Cin, Cout), resident
    bm = bias.reshape(1, Cout).astype(jnp.float32)

    grid = (M_pad // tm,)        # demo (N=2, 8x8): a single grid step
    out = pl.pallas_call(
        _smajor_kernel,
        out_shape=jax.ShapeDtypeStruct((M_pad, Cout), x_nchw.dtype),
        grid_spec=pltpu.PrefetchScalarGridSpec(
            num_scalar_prefetch=0,
            grid=grid,
            in_specs=[
                pl.BlockSpec((tm, Cin),   lambda i: (i, 0)),   # x rows (f32)
                pl.BlockSpec((Cin, Cout), lambda i: (0, 0)),   # W^T (bf16)
                pl.BlockSpec((1, Cout),   lambda i: (0, 0)),   # bias
            ],
            out_specs=pl.BlockSpec((tm, Cout), lambda i: (i, 0)),
        ),
        compiler_params=pltpu.CompilerParams(
            dimension_semantics=("parallel",)),
        cost_estimate=_cost(N, Cin, Cout, HW),
    )(xm, wt, bm)

    out = out[:M].reshape(N, HW, Cout)
    return jnp.transpose(out, (0, 2, 1)).reshape(N, Cout, H, W)


def conv1x1(x_nchw, weight, bias):
    """nn.Conv2d(512, 256, kernel_size=1, stride=1, padding=0) forward, NCHW."""
    HW = x_nchw.shape[2] * x_nchw.shape[3]
    if HW >= 128:
        return _conv1x1_cmajor(x_nchw, weight, bias)
    return _conv1x1_smajor(x_nchw, weight, bias)


if __name__ == "__main__":
    key = jax.random.PRNGKey(0)
    kx, kw, kb = jax.random.split(key, 3)

    # Module fixes Cin=512 -> Cout=256; keep batch/spatial small.
    Nb, Cin, H, W = 2, 512, 8, 8
    Cout = 256

    x = jax.random.normal(kx, (Nb, Cin, H, W), dtype=jnp.float32)
    weight = jax.random.normal(kw, (Cout, Cin, 1, 1), dtype=jnp.float32) / jnp.sqrt(float(Cin))
    bias = jax.random.normal(kb, (Cout,), dtype=jnp.float32) * 0.01

    def ref(xin):
        return (jnp.einsum("nchw,oc->nohw", xin, weight.reshape(Cout, Cin))
                + bias[None, :, None, None])

    # Small-HW (spatial-major, single grid step) path -- the demo shape.
    y = jax.block_until_ready(conv1x1(x, weight, bias))
    assert y.shape == (Nb, Cout, H, W)
    y_ref = ref(x)
    assert jnp.allclose(y, y_ref, atol=5e-2, rtol=5e-2), float(jnp.max(jnp.abs(y - y_ref)))

    # Larger-HW (channel-major, zero-transpose) path, still small.
    x2 = jax.random.normal(kx, (1, Cin, 16, 16), dtype=jnp.float32)
    y2 = jax.block_until_ready(conv1x1(x2, weight, bias))
    assert y2.shape == (1, Cout, 16, 16)
    y2_ref = ref(x2)
    assert jnp.allclose(y2, y2_ref, atol=5e-2, rtol=5e-2), float(jnp.max(jnp.abs(y2 - y2_ref)))

    print("KERNEL_OK")
</pallas_src>

<mosaic_0001>
module attributes {stable_mosaic.version = 11 : i64} {
  func.func @_smajor_kernel(%arg0: i32, %arg1: memref<128x512xf32, #tpu.memory_space<vmem>>, %arg2: memref<512x256xbf16, #tpu.memory_space<vmem>>, %arg3: memref<1x256xf32, #tpu.memory_space<vmem>>, %arg4: memref<128x256xf32, #tpu.memory_space<vmem>>) attributes {dimension_semantics = [#tpu.dimension_semantics<parallel>], iteration_bounds = array<i64: 1>, scalar_prefetch = 0 : i64, scratch_operands = 0 : i64, tpu.core_type = #tpu.core_type<tc>, window_params = [{transform_indices = @transform_0, window_bounds = array<i64: 128, 512>}, {pipeline_mode = #tpu.pipeline_mode<synchronous>, transform_indices = @transform_1, window_bounds = array<i64: 512, 256>}, {pipeline_mode = #tpu.pipeline_mode<synchronous>, transform_indices = @transform_2, window_bounds = array<i64: 1, 256>}, {transform_indices = @transform_3, window_bounds = array<i64: 128, 256>}]} {
    %c0 = arith.constant 0 : index
    %c0_0 = arith.constant 0 : index
    %0 = vector.load %arg1[%c0, %c0_0] : memref<128x512xf32, #tpu.memory_space<vmem>>, vector<128x512xf32>
    %1 = arith.truncf %0 : vector<128x512xf32> to vector<128x512xbf16>
    %c0_1 = arith.constant 0 : index
    %c0_2 = arith.constant 0 : index
    %2 = vector.load %arg2[%c0_1, %c0_2] : memref<512x256xbf16, #tpu.memory_space<vmem>>, vector<512x256xbf16>
    %cst = arith.constant dense<0.000000e+00> : vector<128x256xf32>
    %3 = tpu.matmul %1, %2, %cst {dimension_numbers = #tpu.dot_dimension_numbers<[1], [0], [0], [1], [0, 0, 1, 1], [], []>} : vector<128x512xbf16>, vector<512x256xbf16>, vector<128x256xf32> -> vector<128x256xf32>
    %c0_3 = arith.constant 0 : index
    %c0_4 = arith.constant 0 : index
    %4 = vector.load %arg3[%c0_3, %c0_4] : memref<1x256xf32, #tpu.memory_space<vmem>>, vector<1x256xf32>
    %5 = vector.broadcast %4 : vector<1x256xf32> to vector<128x256xf32>
    %6 = arith.addf %3, %5 : vector<128x256xf32>
    %c0_5 = arith.constant 0 : index
    %c0_6 = arith.constant 0 : index
    %7 = vector.load %arg4[%c0_5, %c0_6] : memref<128x256xf32, #tpu.memory_space<vmem>>, vector<128x256xf32>
    tpu.vector_store %arg4[%c0_5, %c0_6], %6 {strides = array<i32>} : memref<128x256xf32, #tpu.memory_space<vmem>>, vector<128x256xf32>,
    return
  }
  func.func @transform_0(%arg0: i32) -> (i32, i32) {
    %c0_i32 = arith.constant 0 : i32
    %c0_i32_0 = arith.constant 0 : i32
    return %arg0, %c0_i32 : i32, i32
  }
  func.func @transform_1(%arg0: i32) -> (i32, i32) {
    %c0_i32 = arith.constant 0 : i32
    %c0_i32_0 = arith.constant 0 : i32
    %c0_i32_1 = arith.constant 0 : i32
    return %c0_i32, %c0_i32_0 : i32, i32
  }
  func.func @transform_2(%arg0: i32) -> (i32, i32) {
    %c0_i32 = arith.constant 0 : i32
    %c0_i32_0 = arith.constant 0 : i32
    %c0_i32_1 = arith.constant 0 : i32
    return %c0_i32, %c0_i32_0 : i32, i32
  }
  func.func @transform_3(%arg0: i32) -> (i32, i32) {
    %c0_i32 = arith.constant 0 : i32
    %c0_i32_0 = arith.constant 0 : i32
    return %arg0, %c0_i32 : i32, i32
  }
}

</mosaic_0001>

<llo_original>
// kernel: tpu_custom_call.1
$region0: #{tpu_custom_call.1}
  #allocation0 [shape = 'u32[]', space=smem, size = 0x4, offset = 0x4, fixed_abs, tag = 'smem constant byte address 0x4 - core index']
  #allocation1 [shape = 'u32[144,128]{1,0:T(1,128)}', space=vmem, size = 0x12000, scoped, tag = 'internal scratch']
  %s0 = inlined_call_operand.hbm [shape: f32[128,512], index: 0, kind: input, shape index: {}]
  %s1 = inlined_call_operand.hbm [shape: bf16[512,256], index: 1, kind: input, shape index: {}]
  %s2 = inlined_call_operand.vmem [shape: f32[1,256], index: 2, kind: input, shape index: {}]
  %s3 = inlined_call_operand.hbm [shape: f32[128,256], index: 3, kind: output, shape index: {}]
  %s4 = sld [smem:[#allocation0]]
  $region30: #{tpu_custom_call.1} parent=0
    _
  %s6 = ssub.s32 1, %s4
  %s7 = scalar_select 0, %s6, %s4
  $region1: #{tpu_custom_call.1} parent=0
    #allocation2 [shape = 'u8[262144]{0}', space=vmem, size = 0x40000, scoped, tag = 'input window, operand 0, single buffered']
    #allocation3 [shape = 's32[1]{0}', space=sflag, size = 0x4, scoped, tag = 'scoped memory for tpu_custom_call.1']
    #allocation4 [shape = 's32[1]{0}', space=sflag, size = 0x4, scoped, tag = 'scoped memory for tpu_custom_call.1']
    #allocation5 [shape = 'u8[262144]{0}', space=vmem, size = 0x40000, scoped, tag = 'input window, operand 1, single buffered']
    #allocation6 [shape = 's32[1]{0}', space=sflag, size = 0x4, scoped, tag = 'scoped memory for tpu_custom_call.1']
    #allocation7 [shape = 'u8[131072]{0}', space=vmem, size = 0x20000, scoped, tag = 'output window, operand 0, single buffered']
    %8 = vsyncpa [#allocation3], 0
    %9 = vsyncpa [#allocation6], 0
    %10 = vsyncpa [#allocation4], 0
    // Predicated region
    $region2: #{tpu_custom_call.1} parent=1 // pred_check
      _
    $region3: #{tpu_custom_call.1} parent=1 // pred_check_branch
      %12 = sbr.rel (0) target = $region5
    $region4: #{tpu_custom_call.1} parent=1 // pred_region
      %s14 = ssub.s32 8192, 8192
      %15 = vsyncadd [#allocation3], %s14
      %s16 = sshll.u32 [#allocation2], 4
      %s17 = int_to_ptr.vmem [resolvable:$true] %s16
      %22 = dma.hbm_to_vmem [thread:$0]  %s0, 8192, %s17, [#allocation3], 512, 512, 32
    $region5: #{tpu_custom_call.1} parent=1 // pred_fallthru
      _
    // Predicated region
    $region6: #{tpu_custom_call.1} parent=1 // pred_check
      _
    $region7: #{tpu_custom_call.1} parent=1 // pred_check_branch
      %24 = sbr.rel (0) target = $region9
    $region8: #{tpu_custom_call.1} parent=1 // pred_region
      %s26 = ssub.s32 8192, 8192
      %27 = vsyncadd [#allocation6], %s26
      %s28 = sshll.u32 [#allocation5], 4
      %s29 = int_to_ptr.vmem [resolvable:$true] %s28
      %34 = dma.hbm_to_vmem [thread:$0]  %s1, 8192, %s29, [#allocation6], 128, 128, 8
    $region9: #{tpu_custom_call.1} parent=1 // pred_fallthru
      _
    // Predicated region
    $region10: #{tpu_custom_call.1} parent=1 // pred_check
      _
    $region11: #{tpu_custom_call.1} parent=1 // pred_check_branch
      %36 = sbr.rel (0) target = $region13
    $region12: #{tpu_custom_call.1} parent=1 // pred_region
      _
    $region13: #{tpu_custom_call.1} parent=1 // pred_fallthru
      _
    // Predicated region
    $region14: #{tpu_custom_call.1} parent=1 // pred_check
      _
    $region15: #{tpu_custom_call.1} parent=1 // pred_check_branch
      %38 = sbr.rel (0) target = $region17
    $region16: #{tpu_custom_call.1} parent=1 // pred_region
      %39 = dma.done [#allocation3], 8192
    $region17: #{tpu_custom_call.1} parent=1 // pred_fallthru
      _
    // Predicated region
    $region18: #{tpu_custom_call.1} parent=1 // pred_check
      _
    $region19: #{tpu_custom_call.1} parent=1 // pred_check_branch
      %41 = sbr.rel (0) target = $region21
    $region20: #{tpu_custom_call.1} parent=1 // pred_region
      %42 = dma.done [#allocation6], 8192
    $region21: #{tpu_custom_call.1} parent=1 // pred_fallthru
      _
    %v43 = vld [vmem:[#allocation2] sm:$0xff]
    %v44 = vld [vmem:[#allocation2 + $0x8] sm:$0xff]
    %v45 = vld [vmem:[#allocation2 + $0x10] sm:$0xff]
    %v46 = vld [vmem:[#allocation2 + $0x18] sm:$0xff]
    %v47 = vld [vmem:[#allocation2 + $0x20] sm:$0xff]
    %v48 = vld [vmem:[#allocation2 + $0x28] sm:$0xff]
    %v49 = vld [vmem:[#allocation2 + $0x30] sm:$0xff]
    %v50 = vld [vmem:[#allocation2 + $0x38] sm:$0xff]
    %v51 = vld [vmem:[#allocation2 + $0x40] sm:$0xff]
    %v52 = vld [vmem:[#allocation2 + $0x48] sm:$0xff]
    %v53 = vld [vmem:[#allocation2 + $0x50] sm:$0xff]
    %v54 = vld [vmem:[#allocation2 + $0x58] sm:$0xff]
    %v55 = vld [vmem:[#allocation2 + $0x60] sm:$0xff]
    %v56 = vld [vmem:[#allocation2 + $0x68] sm:$0xff]
    %v57 = vld [vmem:[#allocation2 + $0x70] sm:$0xff]
    %v58 = vld [vmem:[#allocation2 + $0x78] sm:$0xff]
    %v59 = vld [vmem:[#allocation2 + $0x80] sm:$0xff]
    %v60 = vld [vmem:[#allocation2 + $0x88] sm:$0xff]
    %v61 = vld [vmem:[#allocation2 + $0x90] sm:$0xff]
    %v62 = vld [vmem:[#allocation2 + $0x98] sm:$0xff]
    %v63 = vld [vmem:[#allocation2 + $0xa0] sm:$0xff]
    %v64 = vld [vmem:[#allocation2 + $0xa8] sm:$0xff]
    %v65 = vld [vmem:[#allocation2 + $0xb0] sm:$0xff]
    %v66 = vld [vmem:[#allocation2 + $0xb8] sm:$0xff]
    %v67 = vld [vmem:[#allocation2 + $0xc0] sm:$0xff]
    %v68 = vld [vmem:[#allocation2 + $0xc8] sm:$0xff]
    %v69 = vld [vmem:[#allocation2 + $0xd0] sm:$0xff]
    %v70 = vld [vmem:[#allocation2 + $0xd8] sm:$0xff]
    %v71 = vld [vmem:[#allocation2 + $0xe0] sm:$0xff]
    %v72 = vld [vmem:[#allocation2 + $0xe8] sm:$0xff]
    %v73 = vld [vmem:[#allocation2 + $0xf0] sm:$0xff]
    %v74 = vld [vmem:[#allocation2 + $0xf8] sm:$0xff]
    %v75 = vld [vmem:[#allocation2 + $0x100] sm:$0xff]
    %v76 = vld [vmem:[#allocation2 + $0x108] sm:$0xff]
    %v77 = vld [vmem:[#allocation2 + $0x110] sm:$0xff]
    %v78 = vld [vmem:[#allocation2 + $0x118] sm:$0xff]
    %v79 = vld [vmem:[#allocation2 + $0x120] sm:$0xff]
    %v80 = vld [vmem:[#allocation2 + $0x128] sm:$0xff]
    %v81 = vld [vmem:[#allocation2 + $0x130] sm:$0xff]
    %v82 = vld [vmem:[#allocation2 + $0x138] sm:$0xff]
    %v83 = vld [vmem:[#allocation2 + $0x140] sm:$0xff]
    %v84 = vld [vmem:[#allocation2 + $0x148] sm:$0xff]
    %v85 = vld [vmem:[#allocation2 + $0x150] sm:$0xff]
    %v86 = vld [vmem:[#allocation2 + $0x158] sm:$0xff]
    %v87 = vld [vmem:[#allocation2 + $0x160] sm:$0xff]
    %v88 = vld [vmem:[#allocation2 + $0x168] sm:$0xff]
    %v89 = vld [vmem:[#allocation2 + $0x170] sm:$0xff]
    %v90 = vld [vmem:[#allocation2 + $0x178] sm:$0xff]
    %v91 = vld [vmem:[#allocation2 + $0x180] sm:$0xff]
    %v92 = vld [vmem:[#allocation2 + $0x188] sm:$0xff]
    %v93 = vld [vmem:[#allocation2 + $0x190] sm:$0xff]
    %v94 = vld [vmem:[#allocation2 + $0x198] sm:$0xff]
    %v95 = vld [vmem:[#allocation2 + $0x1a0] sm:$0xff]
    %v96 = vld [vmem:[#allocation2 + $0x1a8] sm:$0xff]
    %v97 = vld [vmem:[#allocation2 + $0x1b0] sm:$0xff]
    %v98 = vld [vmem:[#allocation2 + $0x1b8] sm:$0xff]
    %v99 = vld [vmem:[#allocation2 + $0x1c0] sm:$0xff]
    %v100 = vld [vmem:[#allocation2 + $0x1c8] sm:$0xff]
    %v101 = vld [vmem:[#allocation2 + $0x1d0] sm:$0xff]
    %v102 = vld [vmem:[#allocation2 + $0x1d8] sm:$0xff]
    %v103 = vld [vmem:[#allocation2 + $0x1e0] sm:$0xff]
    %v104 = vld [vmem:[#allocation2 + $0x1e8] sm:$0xff]
    %v105 = vld [vmem:[#allocation2 + $0x1f0] sm:$0xff]
    %v106 = vld [vmem:[#allocation2 + $0x1f8] sm:$0xff]
    %v107 = vpack.c.bf16 %v47, %v43
    %v108 = vpack.c.bf16 %v48, %v44
    %v109 = vpack.c.bf16 %v49, %v45
    %v110 = vpack.c.bf16 %v50, %v46
    %v111 = vpack.c.bf16 %v55, %v51
    %v112 = vpack.c.bf16 %v56, %v52
    %v113 = vpack.c.bf16 %v57, %v53
    %v114 = vpack.c.bf16 %v58, %v54
    %v115 = vpack.c.bf16 %v63, %v59
    %v116 = vpack.c.bf16 %v64, %v60
    %v117 = vpack.c.bf16 %v65, %v61
    %v118 = vpack.c.bf16 %v66, %v62
    %v119 = vpack.c.bf16 %v71, %v67
    %v120 = vpack.c.bf16 %v72, %v68
    %v121 = vpack.c.bf16 %v73, %v69
    %v122 = vpack.c.bf16 %v74, %v70
    %v123 = vpack.c.bf16 %v79, %v75
    %v124 = vpack.c.bf16 %v80, %v76
    %v125 = vpack.c.bf16 %v81, %v77
    %v126 = vpack.c.bf16 %v82, %v78
    %v127 = vpack.c.bf16 %v87, %v83
    %v128 = vpack.c.bf16 %v88, %v84
    %v129 = vpack.c.bf16 %v89, %v85
    %v130 = vpack.c.bf16 %v90, %v86
    %v131 = vpack.c.bf16 %v95, %v91
    %v132 = vpack.c.bf16 %v96, %v92
    %v133 = vpack.c.bf16 %v97, %v93
    %v134 = vpack.c.bf16 %v98, %v94
    %v135 = vpack.c.bf16 %v103, %v99
    %v136 = vpack.c.bf16 %v104, %v100
    %v137 = vpack.c.bf16 %v105, %v101
    %v138 = vpack.c.bf16 %v106, %v102
    %v139 = vld [vmem:[#allocation5] sm:$0xff]
    %v140 = vld [vmem:[#allocation5 + $0x8] sm:$0xff]
    %v141 = vld [vmem:[#allocation5 + $0x10] sm:$0xff]
    %v142 = vld [vmem:[#allocation5 + $0x18] sm:$0xff]
    %v143 = vld [vmem:[#allocation5 + $0x20] sm:$0xff]
    %v144 = vld [vmem:[#allocation5 + $0x28] sm:$0xff]
    %v145 = vld [vmem:[#allocation5 + $0x30] sm:$0xff]
    %v146 = vld [vmem:[#allocation5 + $0x38] sm:$0xff]
    %v147 = vld [vmem:[#allocation5 + $0x40] sm:$0xff]
    %v148 = vld [vmem:[#allocation5 + $0x48] sm:$0xff]
    %v149 = vld [vmem:[#allocation5 + $0x50] sm:$0xff]
    %v150 = vld [vmem:[#allocation5 + $0x58] sm:$0xff]
    %v151 = vld [vmem:[#allocation5 + $0x60] sm:$0xff]
    %v152 = vld [vmem:[#allocation5 + $0x68] sm:$0xff]
    %v153 = vld [vmem:[#allocation5 + $0x70] sm:$0xff]
    %v154 = vld [vmem:[#allocation5 + $0x78] sm:$0xff]
    %v155 = vld [vmem:[#allocation5 + $0x80] sm:$0xff]
    %v156 = vld [vmem:[#allocation5 + $0x88] sm:$0xff]
    %v157 = vld [vmem:[#allocation5 + $0x90] sm:$0xff]
    %v158 = vld [vmem:[#allocation5 + $0x98] sm:$0xff]
    %v159 = vld [vmem:[#allocation5 + $0xa0] sm:$0xff]
    %v160 = vld [vmem:[#allocation5 + $0xa8] sm:$0xff]
    %v161 = vld [vmem:[#allocation5 + $0xb0] sm:$0xff]
    %v162 = vld [vmem:[#allocation5 + $0xb8] sm:$0xff]
    %v163 = vld [vmem:[#allocation5 + $0xc0] sm:$0xff]
    %v164 = vld [vmem:[#allocation5 + $0xc8] sm:$0xff]
    %v165 = vld [vmem:[#allocation5 + $0xd0] sm:$0xff]
    %v166 = vld [vmem:[#allocation5 + $0xd8] sm:$0xff]
    %v167 = vld [vmem:[#allocation5 + $0xe0] sm:$0xff]
    %v168 = vld [vmem:[#allocation5 + $0xe8] sm:$0xff]
    %v169 = vld [vmem:[#allocation5 + $0xf0] sm:$0xff]
    %v170 = vld [vmem:[#allocation5 + $0xf8] sm:$0xff]
    %v171 = vld [vmem:[#allocation5 + $0x100] sm:$0xff]
    %v172 = vld [vmem:[#allocation5 + $0x108] sm:$0xff]
    %v173 = vld [vmem:[#allocation5 + $0x110] sm:$0xff]
    %v174 = vld [vmem:[#allocation5 + $0x118] sm:$0xff]
    %v175 = vld [vmem:[#allocation5 + $0x120] sm:$0xff]
    %v176 = vld [vmem:[#allocation5 + $0x128] sm:$0xff]
    %v177 = vld [vmem:[#allocation5 + $0x130] sm:$0xff]
    %v178 = vld [vmem:[#allocation5 + $0x138] sm:$0xff]
    %v179 = vld [vmem:[#allocation5 + $0x140] sm:$0xff]
    %v180 = vld [vmem:[#allocation5 + $0x148] sm:$0xff]
    %v181 = vld [vmem:[#allocation5 + $0x150] sm:$0xff]
    %v182 = vld [vmem:[#allocation5 + $0x158] sm:$0xff]
    %v183 = vld [vmem:[#allocation5 + $0x160] sm:$0xff]
    %v184 = vld [vmem:[#allocation5 + $0x168] sm:$0xff]
    %v185 = vld [vmem:[#allocation5 + $0x170] sm:$0xff]
    %v186 = vld [vmem:[#allocation5 + $0x178] sm:$0xff]
    %v187 = vld [vmem:[#allocation5 + $0x180] sm:$0xff]
    %v188 = vld [vmem:[#allocation5 + $0x188] sm:$0xff]
    %v189 = vld [vmem:[#allocation5 + $0x190] sm:$0xff]
    %v190 = vld [vmem:[#allocation5 + $0x198] sm:$0xff]
    %v191 = vld [vmem:[#allocation5 + $0x1a0] sm:$0xff]
    %v192 = vld [vmem:[#allocation5 + $0x1a8] sm:$0xff]
    %v193 = vld [vmem:[#allocation5 + $0x1b0] sm:$0xff]
    %v194 = vld [vmem:[#allocation5 + $0x1b8] sm:$0xff]
    %v195 = vld [vmem:[#allocation5 + $0x1c0] sm:$0xff]
    %v196 = vld [vmem:[#allocation5 + $0x1c8] sm:$0xff]
    %v197 = vld [vmem:[#allocation5 + $0x1d0] sm:$0xff]
    %v198 = vld [vmem:[#allocation5 + $0x1d8] sm:$0xff]
    %v199 = vld [vmem:[#allocation5 + $0x1e0] sm:$0xff]
    %v200 = vld [vmem:[#allocation5 + $0x1e8] sm:$0xff]
    %v201 = vld [vmem:[#allocation5 + $0x1f0] sm:$0xff]
    %v202 = vld [vmem:[#allocation5 + $0x1f8] sm:$0xff]
    %v203 = vld [vmem:[%s2] sm:$0x3]
    %v205 = vlaneseq
    %v206 = vshrl.u32 %v205, 7
    %v207 = vsub.s32 0, %v206
    %v208 = vrot.slane %v203, %v207
    %v209 = vlaneseq
    %v210 = vshrl.u32 %v209, 7
    %v211 = vsub.s32 1, %v210
    %v212 = vrot.slane %v203, %v211
    %v279 = vunpack.c.l.b16 %v139
    %v280 = vunpack.c.h.b16 %v139
    %v281 = vunpack.c.l.b16 %v140
    %v282 = vunpack.c.h.b16 %v140
    %v283 = vunpack.c.l.b16 %v141
    %v284 = vunpack.c.h.b16 %v141
    %v285 = vunpack.c.l.b16 %v142
    %v286 = vunpack.c.h.b16 %v142
    %v287 = vunpack.c.l.b16 %v143
    %v288 = vunpack.c.h.b16 %v143
    %v289 = vunpack.c.l.b16 %v144
    %v290 = vunpack.c.h.b16 %v144
    %v291 = vunpack.c.l.b16 %v145
    %v292 = vunpack.c.h.b16 %v145
    %v293 = vunpack.c.l.b16 %v146
    %v294 = vunpack.c.h.b16 %v146
    %v295 = vunpack.c.l.b16 %v147
    %v296 = vunpack.c.h.b16 %v147
    %v297 = vunpack.c.l.b16 %v148
    %v298 = vunpack.c.h.b16 %v148
    %v299 = vunpack.c.l.b16 %v149
    %v300 = vunpack.c.h.b16 %v149
    %v301 = vunpack.c.l.b16 %v150
    %v302 = vunpack.c.h.b16 %v150
    %v303 = vunpack.c.l.b16 %v151
    %v304 = vunpack.c.h.b16 %v151
    %v305 = vunpack.c.l.b16 %v152
    %v306 = vunpack.c.h.b16 %v152
    %v307 = vunpack.c.l.b16 %v153
    %v308 = vunpack.c.h.b16 %v153
    %v309 = vunpack.c.l.b16 %v154
    %v310 = vunpack.c.h.b16 %v154
    %v311 = vunpack.c.l.b16 %v155
    %v312 = vunpack.c.h.b16 %v155
    %v313 = vunpack.c.l.b16 %v156
    %v314 = vunpack.c.h.b16 %v156
    %v315 = vunpack.c.l.b16 %v157
    %v316 = vunpack.c.h.b16 %v157
    %v317 = vunpack.c.l.b16 %v158
    %v318 = vunpack.c.h.b16 %v158
    %v319 = vunpack.c.l.b16 %v159
    %v320 = vunpack.c.h.b16 %v159
    %v321 = vunpack.c.l.b16 %v160
    %v322 = vunpack.c.h.b16 %v160
    %v323 = vunpack.c.l.b16 %v161
    %v324 = vunpack.c.h.b16 %v161
    %v325 = vunpack.c.l.b16 %v162
    %v326 = vunpack.c.h.b16 %v162
    %v327 = vunpack.c.l.b16 %v163
    %v328 = vunpack.c.h.b16 %v163
    %v329 = vunpack.c.l.b16 %v164
    %v330 = vunpack.c.h.b16 %v164
    %v331 = vunpack.c.l.b16 %v165
    %v332 = vunpack.c.h.b16 %v165
    %v333 = vunpack.c.l.b16 %v166
    %v334 = vunpack.c.h.b16 %v166
    %v335 = vunpack.c.l.b16 %v167
    %v336 = vunpack.c.h.b16 %v167
    %v337 = vunpack.c.l.b16 %v168
    %v338 = vunpack.c.h.b16 %v168
    %v339 = vunpack.c.l.b16 %v169
    %v340 = vunpack.c.h.b16 %v169
    %v341 = vunpack.c.l.b16 %v170
    %v342 = vunpack.c.h.b16 %v170
    %v343 = vunpack.c.l.b16 %v171
    %v344 = vunpack.c.h.b16 %v171
    %v345 = vunpack.c.l.b16 %v172
    %v346 = vunpack.c.h.b16 %v172
    %v347 = vunpack.c.l.b16 %v173
    %v348 = vunpack.c.h.b16 %v173
    %v349 = vunpack.c.l.b16 %v174
    %v350 = vunpack.c.h.b16 %v174
    %v351 = vunpack.c.l.b16 %v175
    %v352 = vunpack.c.h.b16 %v175
    %v353 = vunpack.c.l.b16 %v176
    %v354 = vunpack.c.h.b16 %v176
    %v355 = vunpack.c.l.b16 %v177
    %v356 = vunpack.c.h.b16 %v177
    %v357 = vunpack.c.l.b16 %v178
    %v358 = vunpack.c.h.b16 %v178
    %v359 = vunpack.c.l.b16 %v179
    %v360 = vunpack.c.h.b16 %v179
    %v361 = vunpack.c.l.b16 %v180
    %v362 = vunpack.c.h.b16 %v180
    %v363 = vunpack.c.l.b16 %v181
    %v364 = vunpack.c.h.b16 %v181
    %v365 = vunpack.c.l.b16 %v182
    %v366 = vunpack.c.h.b16 %v182
    %v367 = vunpack.c.l.b16 %v183
    %v368 = vunpack.c.h.b16 %v183
    %v369 = vunpack.c.l.b16 %v184
    %v370 = vunpack.c.h.b16 %v184
    %v371 = vunpack.c.l.b16 %v185
    %v372 = vunpack.c.h.b16 %v185
    %v373 = vunpack.c.l.b16 %v186
    %v374 = vunpack.c.h.b16 %v186
    %v375 = vunpack.c.l.b16 %v187
    %v376 = vunpack.c.h.b16 %v187
    %v377 = vunpack.c.l.b16 %v188
    %v378 = vunpack.c.h.b16 %v188
    %v379 = vunpack.c.l.b16 %v189
    %v380 = vunpack.c.h.b16 %v189
    %v381 = vunpack.c.l.b16 %v190
    %v382 = vunpack.c.h.b16 %v190
    %v383 = vunpack.c.l.b16 %v191
    %v384 = vunpack.c.h.b16 %v191
    %v385 = vunpack.c.l.b16 %v192
    %v386 = vunpack.c.h.b16 %v192
    %v387 = vunpack.c.l.b16 %v193
    %v388 = vunpack.c.h.b16 %v193
    %v389 = vunpack.c.l.b16 %v194
    %v390 = vunpack.c.h.b16 %v194
    %v391 = vunpack.c.l.b16 %v195
    %v392 = vunpack.c.h.b16 %v195
    %v393 = vunpack.c.l.b16 %v196
    %v394 = vunpack.c.h.b16 %v196
    %v395 = vunpack.c.l.b16 %v197
    %v396 = vunpack.c.h.b16 %v197
    %v397 = vunpack.c.l.b16 %v198
    %v398 = vunpack.c.h.b16 %v198
    %v399 = vunpack.c.l.b16 %v199
    %v400 = vunpack.c.h.b16 %v199
    %v401 = vunpack.c.l.b16 %v200
    %v402 = vunpack.c.h.b16 %v200
    %v403 = vunpack.c.l.b16 %v201
    %v404 = vunpack.c.h.b16 %v201
    %v405 = vunpack.c.l.b16 %v202
    %v406 = vunpack.c.h.b16 %v202
    %v407 = vpack.c.b16 %v281, %v279
    %v408 = vpack.c.b16 %v282, %v280
    %v409 = vpack.c.b16 %v285, %v283
    %v410 = vpack.c.b16 %v286, %v284
    %v411 = vpack.c.b16 %v289, %v287
    %v412 = vpack.c.b16 %v290, %v288
    %v413 = vpack.c.b16 %v293, %v291
    %v414 = vpack.c.b16 %v294, %v292
    %v415 = vpack.c.b16 %v297, %v295
    %v416 = vpack.c.b16 %v298, %v296
    %v417 = vpack.c.b16 %v301, %v299
    %v418 = vpack.c.b16 %v302, %v300
    %v419 = vpack.c.b16 %v305, %v303
    %v420 = vpack.c.b16 %v306, %v304
    %v421 = vpack.c.b16 %v309, %v307
    %v422 = vpack.c.b16 %v310, %v308
    %v423 = vpack.c.b16 %v313, %v311
    %v424 = vpack.c.b16 %v314, %v312
    %v425 = vpack.c.b16 %v317, %v315
    %v426 = vpack.c.b16 %v318, %v316
    %v427 = vpack.c.b16 %v321, %v319
    %v428 = vpack.c.b16 %v322, %v320
    %v429 = vpack.c.b16 %v325, %v323
    %v430 = vpack.c.b16 %v326, %v324
    %v431 = vpack.c.b16 %v329, %v327
    %v432 = vpack.c.b16 %v330, %v328
    %v433 = vpack.c.b16 %v333, %v331
    %v434 = vpack.c.b16 %v334, %v332
    %v435 = vpack.c.b16 %v337, %v335
    %v436 = vpack.c.b16 %v338, %v336
    %v437 = vpack.c.b16 %v341, %v339
    %v438 = vpack.c.b16 %v342, %v340
    %v439 = vpack.c.b16 %v345, %v343
    %v440 = vpack.c.b16 %v346, %v344
    %v441 = vpack.c.b16 %v349, %v347
    %v442 = vpack.c.b16 %v350, %v348
    %v443 = vpack.c.b16 %v353, %v351
    %v444 = vpack.c.b16 %v354, %v352
    %v445 = vpack.c.b16 %v357, %v355
    %v446 = vpack.c.b16 %v358, %v356
    %v447 = vpack.c.b16 %v361, %v359
    %v448 = vpack.c.b16 %v362, %v360
    %v449 = vpack.c.b16 %v365, %v363
    %v450 = vpack.c.b16 %v366, %v364
    %v451 = vpack.c.b16 %v369, %v367
    %v452 = vpack.c.b16 %v370, %v368
    %v453 = vpack.c.b16 %v373, %v371
    %v454 = vpack.c.b16 %v374, %v372
    %v455 = vpack.c.b16 %v377, %v375
    %v456 = vpack.c.b16 %v378, %v376
    %v457 = vpack.c.b16 %v381, %v379
    %v458 = vpack.c.b16 %v382, %v380
    %v459 = vpack.c.b16 %v385, %v383
    %v460 = vpack.c.b16 %v386, %v384
    %v461 = vpack.c.b16 %v389, %v387
    %v462 = vpack.c.b16 %v390, %v388
    %v463 = vpack.c.b16 %v393, %v391
    %v464 = vpack.c.b16 %v394, %v392
    %v465 = vpack.c.b16 %v397, %v395
    %v466 = vpack.c.b16 %v398, %v396
    %v467 = vpack.c.b16 %v401, %v399
    %v468 = vpack.c.b16 %v402, %v400
    %v469 = vpack.c.b16 %v405, %v403
    %v470 = vpack.c.b16 %v406, %v404
    %535 = vmatprep.subr.bf16.mxu0 %v408
    %536 = vmatpush1.bf16.msra.mxu0 %v407
    %537 = vmatprep.subr.bf16.mxu0 %v410
    %538 = vmatpush1.bf16.msra.mxu0 %v409
    %539 = vmatprep.subr.bf16.mxu0 %v412
    %540 = vmatpush1.bf16.msra.mxu0 %v411
    %541 = vmatprep.subr.bf16.mxu0 %v414
    %542 = vmatpush1.bf16.msra.mxu0 %v413
    %543 = vmatprep.subr.bf16.mxu0 %v416
    %544 = vmatpush1.bf16.msra.mxu0 %v415
    %545 = vmatprep.subr.bf16.mxu0 %v418
    %546 = vmatpush1.bf16.msra.mxu0 %v417
    %547 = vmatprep.subr.bf16.mxu0 %v420
    %548 = vmatpush1.bf16.msra.mxu0 %v419
    %549 = vmatprep.subr.bf16.mxu0 %v422
    %550 = vmatpush1.bf16.msra.mxu0 %v421
    %551 = vmatprep.subr.bf16.mxu0 %v424
    %552 = vmatpush1.bf16.msra.mxu0 %v423
    %553 = vmatprep.subr.bf16.mxu0 %v426
    %554 = vmatpush1.bf16.msra.mxu0 %v425
    %555 = vmatprep.subr.bf16.mxu0 %v428
    %556 = vmatpush1.bf16.msra.mxu0 %v427
    %557 = vmatprep.subr.bf16.mxu0 %v430
    %558 = vmatpush1.bf16.msra.mxu0 %v429
    %559 = vmatprep.subr.bf16.mxu0 %v432
    %560 = vmatpush1.bf16.msra.mxu0 %v431
    %561 = vmatprep.subr.bf16.mxu0 %v434
    %562 = vmatpush1.bf16.msra.mxu0 %v433
    %563 = vmatprep.subr.bf16.mxu0 %v436
    %564 = vmatpush1.bf16.msra.mxu0 %v435
    %565 = vmatprep.subr.bf16.mxu0 %v438
    %566 = vmatpush1.bf16.msra.mxu0 %v437
    %567 = vmatprep.mubr.bf16.mxu0 %v108
    %568 = vmatmul.mubr.bf16.gmra.mrb[0].mxu0 %v107
    %v569 = vpop.f32.mrb[0].mxu0
    %v570 = vadd.f32 %v208, %v569
    %v571 = vpop.f32.mrb[0].mxu0
    %v572 = vadd.f32 %v212, %v571
    %v573 = vpop.f32.mrb[0].mxu0
    %v574 = vadd.f32 %v208, %v573
    %v575 = vpop.f32.mrb[0].mxu0
    %v576 = vadd.f32 %v212, %v575
    %577 = vmatprep.mubr.bf16.mxu0 %v112
    %578 = vmatmul.mubr.bf16.gmra.mrb[0].mxu0 %v111
    %v579 = vpop.f32.mrb[0].mxu0
    %v580 = vadd.f32 %v208, %v579
    %v581 = vpop.f32.mrb[0].mxu0
    %v582 = vadd.f32 %v212, %v581
    %v583 = vpop.f32.mrb[0].mxu0
    %v584 = vadd.f32 %v208, %v583
    %v585 = vpop.f32.mrb[0].mxu0
    %v586 = vadd.f32 %v212, %v585
    %587 = vmatprep.mubr.bf16.mxu0 %v116
    %588 = vmatmul.mubr.bf16.gmra.mrb[0].mxu0 %v115
    %v589 = vpop.f32.mrb[0].mxu0
    %v590 = vadd.f32 %v208, %v589
    %v591 = vpop.f32.mrb[0].mxu0
    %v592 = vadd.f32 %v212, %v591
    %v593 = vpop.f32.mrb[0].mxu0
    %v594 = vadd.f32 %v208, %v593
    %v595 = vpop.f32.mrb[0].mxu0
    %v596 = vadd.f32 %v212, %v595
    %597 = vmatprep.mubr.bf16.mxu0 %v120
    %598 = vmatmul.mubr.bf16.gmra.mrb[0].mxu0 %v119
    %v599 = vpop.f32.mrb[0].mxu0
    %v600 = vadd.f32 %v208, %v599
    %v601 = vpop.f32.mrb[0].mxu0
    %v602 = vadd.f32 %v212, %v601
    %v603 = vpop.f32.mrb[0].mxu0
    %v604 = vadd.f32 %v208, %v603
    %v605 = vpop.f32.mrb[0].mxu0
    %v606 = vadd.f32 %v212, %v605
    %607 = vmatprep.mubr.bf16.mxu0 %v124
    %608 = vmatmul.mubr.bf16.gmra.mrb[0].mxu0 %v123
    %v609 = vpop.f32.mrb[0].mxu0
    %v610 = vadd.f32 %v208, %v609
    %v611 = vpop.f32.mrb[0].mxu0
    %v612 = vadd.f32 %v212, %v611
    %v613 = vpop.f32.mrb[0].mxu0
    %v614 = vadd.f32 %v208, %v613
    %v615 = vpop.f32.mrb[0].mxu0
    %v616 = vadd.f32 %v212, %v615
    %617 = vmatprep.mubr.bf16.mxu0 %v128
    %618 = vmatmul.mubr.bf16.gmra.mrb[0].mxu0 %v127
    %v619 = vpop.f32.mrb[0].mxu0
    %v620 = vadd.f32 %v208, %v619
    %v621 = vpop.f32.mrb[0].mxu0
    %v622 = vadd.f32 %v212, %v621
    %v623 = vpop.f32.mrb[0].mxu0
    %v624 = vadd.f32 %v208, %v623
    %v625 = vpop.f32.mrb[0].mxu0
    %v626 = vadd.f32 %v212, %v625
    %627 = vmatprep.mubr.bf16.mxu0 %v132
    %628 = vmatmul.mubr.bf16.gmra.mrb[0].mxu0 %v131
    %v629 = vpop.f32.mrb[0].mxu0
    %v630 = vadd.f32 %v208, %v629
    %v631 = vpop.f32.mrb[0].mxu0
    %v632 = vadd.f32 %v212, %v631
    %v633 = vpop.f32.mrb[0].mxu0
    %v634 = vadd.f32 %v208, %v633
    %v635 = vpop.f32.mrb[0].mxu0
    %v636 = vadd.f32 %v212, %v635
    %637 = vmatprep.mubr.bf16.mxu0 %v136
    %638 = vmatmul.mubr.bf16.gmra.mrb[0].mxu0 %v135
    %v639 = vpop.f32.mrb[0].mxu0
    %v640 = vadd.f32 %v208, %v639
    %v641 = vpop.f32.mrb[0].mxu0
    %v642 = vadd.f32 %v212, %v641
    %v643 = vpop.f32.mrb[0].mxu0
    %v644 = vadd.f32 %v208, %v643
    %v645 = vpop.f32.mrb[0].mxu0
    %v646 = vadd.f32 %v212, %v645
    %647 = vdwg.mxu0
    %648 = vmatprep.subr.bf16.mxu0 %v440
    %649 = vmatpush1.bf16.msra.mxu0 %v439
    %650 = vmatprep.subr.bf16.mxu0 %v442
    %651 = vmatpush1.bf16.msra.mxu0 %v441
    %652 = vmatprep.subr.bf16.mxu0 %v444
    %653 = vmatpush1.bf16.msra.mxu0 %v443
    %654 = vmatprep.subr.bf16.mxu0 %v446
    %655 = vmatpush1.bf16.msra.mxu0 %v445
    %656 = vmatprep.subr.bf16.mxu0 %v448
    %657 = vmatpush1.bf16.msra.mxu0 %v447
    %658 = vmatprep.subr.bf16.mxu0 %v450
    %659 = vmatpush1.bf16.msra.mxu0 %v449
    %660 = vmatprep.subr.bf16.mxu0 %v452
    %661 = vmatpush1.bf16.msra.mxu0 %v451
    %662 = vmatprep.subr.bf16.mxu0 %v454
    %663 = vmatpush1.bf16.msra.mxu0 %v453
    %664 = vmatprep.subr.bf16.mxu0 %v456
    %665 = vmatpush1.bf16.msra.mxu0 %v455
    %666 = vmatprep.subr.bf16.mxu0 %v458
    %667 = vmatpush1.bf16.msra.mxu0 %v457
    %668 = vmatprep.subr.bf16.mxu0 %v460
    %669 = vmatpush1.bf16.msra.mxu0 %v459
    %670 = vmatprep.subr.bf16.mxu0 %v462
    %671 = vmatpush1.bf16.msra.mxu0 %v461
    %672 = vmatprep.subr.bf16.mxu0 %v464
    %673 = vmatpush1.bf16.msra.mxu0 %v463
    %674 = vmatprep.subr.bf16.mxu0 %v466
    %675 = vmatpush1.bf16.msra.mxu0 %v465
    %676 = vmatprep.subr.bf16.mxu0 %v468
    %677 = vmatpush1.bf16.msra.mxu0 %v467
    %678 = vmatprep.subr.bf16.mxu0 %v470
    %679 = vmatpush1.bf16.msra.mxu0 %v469
    %680 = vmatprep.mubr.bf16.mxu0 %v110
    %681 = vmatmul.mubr.bf16.gmra.mrb[0].mxu0 %v109
    %v682 = vpop.f32.mrb[0].mxu0
    %v683 = vadd.f32 %v570, %v682
    %v684 = vpop.f32.mrb[0].mxu0
    %v685 = vadd.f32 %v572, %v684
    %v686 = vpop.f32.mrb[0].mxu0
    %v687 = vadd.f32 %v574, %v686
    %v688 = vpop.f32.mrb[0].mxu0
    %v689 = vadd.f32 %v576, %v688
    %690 = vmatprep.mubr.bf16.mxu0 %v114
    %691 = vmatmul.mubr.bf16.gmra.mrb[0].mxu0 %v113
    %v692 = vpop.f32.mrb[0].mxu0
    %v693 = vadd.f32 %v580, %v692
    %v694 = vpop.f32.mrb[0].mxu0
    %v695 = vadd.f32 %v582, %v694
    %v696 = vpop.f32.mrb[0].mxu0
    %v697 = vadd.f32 %v584, %v696
    %v698 = vpop.f32.mrb[0].mxu0
    %v699 = vadd.f32 %v586, %v698
    %700 = vmatprep.mubr.bf16.mxu0 %v118
    %701 = vmatmul.mubr.bf16.gmra.mrb[0].mxu0 %v117
    %v702 = vpop.f32.mrb[0].mxu0
    %v703 = vadd.f32 %v590, %v702
    %v704 = vpop.f32.mrb[0].mxu0
    %v705 = vadd.f32 %v592, %v704
    %v706 = vpop.f32.mrb[0].mxu0
    %v707 = vadd.f32 %v594, %v706
    %v708 = vpop.f32.mrb[0].mxu0
    %v709 = vadd.f32 %v596, %v708
    %710 = vmatprep.mubr.bf16.mxu0 %v122
    %711 = vmatmul.mubr.bf16.gmra.mrb[0].mxu0 %v121
    %v712 = vpop.f32.mrb[0].mxu0
    %v713 = vadd.f32 %v600, %v712
    %v714 = vpop.f32.mrb[0].mxu0
    %v715 = vadd.f32 %v602, %v714
    %v716 = vpop.f32.mrb[0].mxu0
    %v717 = vadd.f32 %v604, %v716
    %v718 = vpop.f32.mrb[0].mxu0
    %v719 = vadd.f32 %v606, %v718
    %720 = vmatprep.mubr.bf16.mxu0 %v126
    %721 = vmatmul.mubr.bf16.gmra.mrb[0].mxu0 %v125
    %v722 = vpop.f32.mrb[0].mxu0
    %v723 = vadd.f32 %v610, %v722
    %v724 = vpop.f32.mrb[0].mxu0
    %v725 = vadd.f32 %v612, %v724
    %v726 = vpop.f32.mrb[0].mxu0
    %v727 = vadd.f32 %v614, %v726
    %v728 = vpop.f32.mrb[0].mxu0
    %v729 = vadd.f32 %v616, %v728
    %730 = vmatprep.mubr.bf16.mxu0 %v130
    %731 = vmatmul.mubr.bf16.gmra.mrb[0].mxu0 %v129
    %v732 = vpop.f32.mrb[0].mxu0
    %v733 = vadd.f32 %v620, %v732
    %v734 = vpop.f32.mrb[0].mxu0
    %v735 = vadd.f32 %v622, %v734
    %v736 = vpop.f32.mrb[0].mxu0
    %v737 = vadd.f32 %v624, %v736
    %v738 = vpop.f32.mrb[0].mxu0
    %v739 = vadd.f32 %v626, %v738
    %740 = vmatprep.mubr.bf16.mxu0 %v134
    %741 = vmatmul.mubr.bf16.gmra.mrb[0].mxu0 %v133
    %v742 = vpop.f32.mrb[0].mxu0
    %v743 = vadd.f32 %v630, %v742
    %v744 = vpop.f32.mrb[0].mxu0
    %v745 = vadd.f32 %v632, %v744
    %v746 = vpop.f32.mrb[0].mxu0
    %v747 = vadd.f32 %v634, %v746
    %v748 = vpop.f32.mrb[0].mxu0
    %v749 = vadd.f32 %v636, %v748
    %750 = vmatprep.mubr.bf16.mxu0 %v138
    %751 = vmatmul.mubr.bf16.gmra.mrb[0].mxu0 %v137
    %v752 = vpop.f32.mrb[0].mxu0
    %v753 = vadd.f32 %v640, %v752
    %v754 = vpop.f32.mrb[0].mxu0
    %v755 = vadd.f32 %v642, %v754
    %v756 = vpop.f32.mrb[0].mxu0
    %v757 = vadd.f32 %v644, %v756
    %v758 = vpop.f32.mrb[0].mxu0
    %v759 = vadd.f32 %v646, %v758
    %760 = vdwg.mxu0
    %761 = vst [vmem:[#allocation7] sm:$0xff] %v683
    %762 = vst [vmem:[#allocation7 + $0x8] sm:$0xff] %v685
    %763 = vst [vmem:[#allocation7 + $0x10] sm:$0xff] %v687
    %764 = vst [vmem:[#allocation7 + $0x18] sm:$0xff] %v689
    %765 = vst [vmem:[#allocation7 + $0x20] sm:$0xff] %v693
    %766 = vst [vmem:[#allocation7 + $0x28] sm:$0xff] %v695
    %767 = vst [vmem:[#allocation7 + $0x30] sm:$0xff] %v697
    %768 = vst [vmem:[#allocation7 + $0x38] sm:$0xff] %v699
    %769 = vst [vmem:[#allocation7 + $0x40] sm:$0xff] %v703
    %770 = vst [vmem:[#allocation7 + $0x48] sm:$0xff] %v705
    %771 = vst [vmem:[#allocation7 + $0x50] sm:$0xff] %v707
    %772 = vst [vmem:[#allocation7 + $0x58] sm:$0xff] %v709
    %773 = vst [vmem:[#allocation7 + $0x60] sm:$0xff] %v713
    %774 = vst [vmem:[#allocation7 + $0x68] sm:$0xff] %v715
    %775 = vst [vmem:[#allocation7 + $0x70] sm:$0xff] %v717
    %776 = vst [vmem:[#allocation7 + $0x78] sm:$0xff] %v719
    %777 = vst [vmem:[#allocation7 + $0x80] sm:$0xff] %v723
    %778 = vst [vmem:[#allocation7 + $0x88] sm:$0xff] %v725
    %779 = vst [vmem:[#allocation7 + $0x90] sm:$0xff] %v727
    %780 = vst [vmem:[#allocation7 + $0x98] sm:$0xff] %v729
    %781 = vst [vmem:[#allocation7 + $0xa0] sm:$0xff] %v733
    %782 = vst [vmem:[#allocation7 + $0xa8] sm:$0xff] %v735
    %783 = vst [vmem:[#allocation7 + $0xb0] sm:$0xff] %v737
    %784 = vst [vmem:[#allocation7 + $0xb8] sm:$0xff] %v739
    %785 = vst [vmem:[#allocation7 + $0xc0] sm:$0xff] %v743
    %786 = vst [vmem:[#allocation7 + $0xc8] sm:$0xff] %v745
    %787 = vst [vmem:[#allocation7 + $0xd0] sm:$0xff] %v747
    %788 = vst [vmem:[#allocation7 + $0xd8] sm:$0xff] %v749
    %789 = vst [vmem:[#allocation7 + $0xe0] sm:$0xff] %v753
    %790 = vst [vmem:[#allocation7 + $0xe8] sm:$0xff] %v755
    %791 = vst [vmem:[#allocation7 + $0xf0] sm:$0xff] %v757
    %792 = vst [vmem:[#allocation7 + $0xf8] sm:$0xff] %v759
    // Predicated region
    $region22: #{tpu_custom_call.1} parent=1 // pred_check
      _
    $region23: #{tpu_custom_call.1} parent=1 // pred_check_branch
      %794 = sbr.rel (0) target = $region25
    $region24: #{tpu_custom_call.1} parent=1 // pred_region
      %s796 = ssub.s32 4096, 4096
      %797 = vsyncadd [#allocation4], %s796
      %s798 = sshll.u32 [#allocation7], 4
      %s799 = int_to_ptr.vmem [resolvable:$true] %s798
      %804 = dma.vmem_to_hbm [thread:$0]  %s799, 4096, %s3, [#allocation4], 256, 256, 16
    $region25: #{tpu_custom_call.1} parent=1 // pred_fallthru
      _
    // Predicated region
    $region26: #{tpu_custom_call.1} parent=1 // pred_check
      _
    $region27: #{tpu_custom_call.1} parent=1 // pred_check_branch
      %806 = sbr.rel (0) target = $region29
    $region28: #{tpu_custom_call.1} parent=1 // pred_region
      %807 = dma.done [#allocation4], 4096
    $region29: #{tpu_custom_call.1} parent=1 // pred_fallthru
      _
    %808 = vsyncpa [#allocation3], 1
    %809 = vsyncpa [#allocation6], 1
    %810 = vsyncpa [#allocation4], 1

</llo_original>
